<compile_context>
chip_gen: v7x
topology: tpu7x:2x2x1
jax: 0.10.0
libtpu: 0.0.40
codegen_flags: <defaults>
</compile_context>

<pallas_src>
import functools

import jax
import jax.numpy as jnp
from jax.experimental import pallas as pl
from jax.experimental.pallas import tpu as pltpu

IN_F = 123
H = [123, 123, 50]
OUT_F = 1
PAD = 128          # lane padding for hidden / output feature dims
BN_EPS = 1e-5


def _weather_kernel(x_ref, w1_ref, ws_ref, bs_ref, o_ref):
    """Fused 4-layer MLP on one batch tile.

    x_ref  : (TB, 123)      f32   input activations (current batch tile)
    w1_ref : (123, 128)     bf16  layer-1 weight (BN folded, out-cols padded)
    ws_ref : (3, 128, 128)  bf16  layers 2..4 weights (BN folded, zero-padded)
    bs_ref : (4, 1, 128)    f32   folded biases (all zero for this init)
    o_ref  : (TB, 1)        f32   final prediction
    """
    # Layer 1: Linear(123->123) + folded BN, ReLU.  (Dropout = identity.)
    h = jnp.dot(x_ref[...].astype(jnp.bfloat16), w1_ref[...],
                preferred_element_type=jnp.float32)
    h = jnp.maximum(h + bs_ref[0], 0.0)

    # Layer 2: Linear(123->123) + folded BN, ReLU.  (Dropout = identity.)
    h = jnp.dot(h.astype(jnp.bfloat16), ws_ref[0],
                preferred_element_type=jnp.float32)
    h = jnp.maximum(h + bs_ref[1], 0.0)

    # Layer 3: Linear(123->50) + folded BN, ReLU.
    h = jnp.dot(h.astype(jnp.bfloat16), ws_ref[1],
                preferred_element_type=jnp.float32)
    h = jnp.maximum(h + bs_ref[2], 0.0)

    # Layer 4: Linear(50->1).  Only column 0 of the padded result is real.
    out = jnp.dot(h.astype(jnp.bfloat16), ws_ref[2],
                  preferred_element_type=jnp.float32) + bs_ref[3]
    o_ref[...] = out[:, :OUT_F]


def _round_up(n, m):
    return ((n + m - 1) // m) * m


def init_params(key):
    """Parameters matching Weather._initialize_weights, with eval-mode
    BatchNorm folded into the Linear weights and weights stored in bf16."""
    dims = [(IN_F, H[0]), (H[0], H[1]), (H[1], H[2]), (H[2], OUT_F)]
    bn_scale = 1.0 / float(jnp.sqrt(jnp.float32(1.0 + BN_EPS)))

    raw = []
    for i, (fan_in, fan_out) in enumerate(dims):
        key, sub = jax.random.split(key)
        # kaiming_normal_(nonlinearity='relu'): std = sqrt(2 / fan_in); bias = 0
        std = (2.0 / fan_in) ** 0.5
        w = jax.random.normal(sub, (fan_in, fan_out), dtype=jnp.float32) * std
        if i < 3:
            # Fold eval-mode BatchNorm: y = (x@W + b) / sqrt(1+eps)  (beta=0, mean=0)
            w = w * bn_scale
        raw.append(w)

    # Layer-1 weight: (123, 128), pad output columns with zeros -> pad lanes inert.
    w1 = jnp.zeros((IN_F, PAD), jnp.float32).at[:, : H[0]].set(raw[0])
    w1 = w1.astype(jnp.bfloat16)

    # Layers 2..4 weights stacked into one resident (3, 128, 128) bf16 slab.
    stack = []
    for w in raw[1:]:
        wp = jnp.zeros((PAD, PAD), jnp.float32)
        wp = wp.at[: w.shape[0], : w.shape[1]].set(w)
        stack.append(wp)
    wstack = jnp.stack(stack).astype(jnp.bfloat16)

    # Folded biases: Linear bias = 0 and BN beta = 0 / mean = 0 -> all zeros.
    bstack = jnp.zeros((4, 1, PAD), jnp.float32)

    return {"w1": w1, "wstack": wstack, "bstack": bstack}


@functools.partial(jax.jit, static_argnames=("block_b",))
def weather_forward(x, params, block_b=None):
    """x: (B, 1, 123) float32  ->  (B, 1) float32"""
    x2 = jnp.squeeze(x, axis=1)                      # (B, 123), free reshape
    B = x2.shape[0]
    if block_b is None:
        block_b = min(512, _round_up(B, 8))          # batch tile (sublane mult of 8)
    grid = (pl.cdiv(B, block_b),)

    return pl.pallas_call(
        _weather_kernel,
        out_shape=jax.ShapeDtypeStruct((B, OUT_F), jnp.float32),
        grid=grid,
        in_specs=[
            # Batch-tiled input: double-buffered across grid steps.
            pl.BlockSpec((block_b, IN_F), lambda i: (i, 0)),
            # Weights / biases: constant index_map -> VMEM-resident.
            pl.BlockSpec((IN_F, PAD), lambda i: (0, 0)),
            pl.BlockSpec((3, PAD, PAD), lambda i: (0, 0, 0)),
            pl.BlockSpec((4, 1, PAD), lambda i: (0, 0, 0)),
        ],
        out_specs=pl.BlockSpec((block_b, OUT_F), lambda i: (i, 0)),
        compiler_params=pltpu.CompilerParams(
            dimension_semantics=("parallel",),       # shards batch grid on v7x's 2 TCs
        ),
    )(x2, params["w1"], params["wstack"], params["bstack"])


def _reference(x, params):
    """Pure-JAX reference mirroring the kernel's bf16-weight / f32-accum math."""
    h = jnp.squeeze(x, axis=1)                       # (B, 123) f32
    bs = params["bstack"]
    h = jnp.dot(h.astype(jnp.bfloat16), params["w1"],
                preferred_element_type=jnp.float32) + bs[0]
    h = jnp.maximum(h, 0.0)
    for j in range(2):
        h = jnp.dot(h.astype(jnp.bfloat16), params["wstack"][j],
                    preferred_element_type=jnp.float32) + bs[j + 1]
        h = jnp.maximum(h, 0.0)
    out = jnp.dot(h.astype(jnp.bfloat16), params["wstack"][2],
                  preferred_element_type=jnp.float32) + bs[3]
    return out[:, :OUT_F]


if __name__ == "__main__":
    key = jax.random.PRNGKey(0)
    k_param, k_x = jax.random.split(key)
    params = init_params(k_param)

    # (B, block_b): one exact-division case, one partial-last-block case.
    for B, tb in [(32, 8), (20, 8)]:
        x = jax.random.normal(jax.random.fold_in(k_x, B), (B, 1, IN_F),
                              dtype=jnp.float32)
        out = jax.block_until_ready(weather_forward(x, params, block_b=tb))
        ref = _reference(x, params)
        assert out.shape == (B, OUT_F), (B, out.shape)
        assert jnp.allclose(out, ref, atol=2e-3, rtol=2e-3), (B, out, ref)

    print("KERNEL_OK")
</pallas_src>

<mosaic_0001>
module attributes {stable_mosaic.version = 11 : i64} {
  func.func @_weather_kernel(%arg0: i32, %arg1: memref<8x123xf32, #tpu.memory_space<vmem>>, %arg2: memref<123x128xbf16, #tpu.memory_space<vmem>>, %arg3: memref<3x128x128xbf16, #tpu.memory_space<vmem>>, %arg4: memref<4x1x128xf32, #tpu.memory_space<vmem>>, %arg5: memref<8x1xf32, #tpu.memory_space<vmem>>) attributes {dimension_semantics = [#tpu.dimension_semantics<parallel>], iteration_bounds = array<i64: 4>, scalar_prefetch = 0 : i64, scratch_operands = 0 : i64, tpu.core_type = #tpu.core_type<tc>, window_params = [{transform_indices = @transform_0, window_bounds = array<i64: 8, 123>}, {pipeline_mode = #tpu.pipeline_mode<synchronous>, transform_indices = @transform_1, window_bounds = array<i64: 123, 128>}, {pipeline_mode = #tpu.pipeline_mode<synchronous>, transform_indices = @transform_2, window_bounds = array<i64: 3, 128, 128>}, {pipeline_mode = #tpu.pipeline_mode<synchronous>, transform_indices = @transform_3, window_bounds = array<i64: 4, 1, 128>}, {transform_indices = @transform_4, window_bounds = array<i64: 8, 1>}]} {
    %c0 = arith.constant 0 : index
    %c0_0 = arith.constant 0 : index
    %0 = vector.load %arg1[%c0, %c0_0] : memref<8x123xf32, #tpu.memory_space<vmem>>, vector<8x123xf32>
    %1 = arith.truncf %0 : vector<8x123xf32> to vector<8x123xbf16>
    %c0_1 = arith.constant 0 : index
    %c0_2 = arith.constant 0 : index
    %2 = vector.load %arg2[%c0_1, %c0_2] : memref<123x128xbf16, #tpu.memory_space<vmem>>, vector<123x128xbf16>
    %cst = arith.constant dense<0.000000e+00> : vector<8x128xf32>
    %3 = tpu.matmul %1, %2, %cst {dimension_numbers = #tpu.dot_dimension_numbers<[1], [0], [0], [1], [0, 0, 1, 1], [], []>} : vector<8x123xbf16>, vector<123x128xbf16>, vector<8x128xf32> -> vector<8x128xf32>
    %c0_3 = arith.constant 0 : index
    %c0_4 = arith.constant 0 : index
    %c0_5 = arith.constant 0 : index
    %4 = vector.load %arg4[%c0_3, %c0_4, %c0_5] : memref<4x1x128xf32, #tpu.memory_space<vmem>>, vector<1x1x128xf32>
    %5 = vector.shape_cast %4 : vector<1x1x128xf32> to vector<1x128xf32>
    %6 = vector.broadcast %5 : vector<1x128xf32> to vector<8x128xf32>
    %7 = arith.addf %3, %6 : vector<8x128xf32>
    %cst_6 = arith.constant 0.000000e+00 : f32
    %8 = vector.broadcast %cst_6 : f32 to vector<8x128xf32>
    %9 = arith.maximumf %7, %8 : vector<8x128xf32>
    %10 = arith.truncf %9 : vector<8x128xf32> to vector<8x128xbf16>
    %c0_7 = arith.constant 0 : index
    %c0_8 = arith.constant 0 : index
    %c0_9 = arith.constant 0 : index
    %11 = vector.load %arg3[%c0_7, %c0_8, %c0_9] : memref<3x128x128xbf16, #tpu.memory_space<vmem>>, vector<1x128x128xbf16>
    %12 = vector.shape_cast %11 : vector<1x128x128xbf16> to vector<128x128xbf16>
    %cst_10 = arith.constant dense<0.000000e+00> : vector<8x128xf32>
    %13 = tpu.matmul %10, %12, %cst_10 {dimension_numbers = #tpu.dot_dimension_numbers<[1], [0], [0], [1], [0, 0, 1, 1], [], []>} : vector<8x128xbf16>, vector<128x128xbf16>, vector<8x128xf32> -> vector<8x128xf32>
    %c1 = arith.constant 1 : index
    %c0_11 = arith.constant 0 : index
    %c0_12 = arith.constant 0 : index
    %14 = vector.load %arg4[%c1, %c0_11, %c0_12] : memref<4x1x128xf32, #tpu.memory_space<vmem>>, vector<1x1x128xf32>
    %15 = vector.shape_cast %14 : vector<1x1x128xf32> to vector<1x128xf32>
    %16 = vector.broadcast %15 : vector<1x128xf32> to vector<8x128xf32>
    %17 = arith.addf %13, %16 : vector<8x128xf32>
    %cst_13 = arith.constant 0.000000e+00 : f32
    %18 = vector.broadcast %cst_13 : f32 to vector<8x128xf32>
    %19 = arith.maximumf %17, %18 : vector<8x128xf32>
    %20 = arith.truncf %19 : vector<8x128xf32> to vector<8x128xbf16>
    %c1_14 = arith.constant 1 : index
    %c0_15 = arith.constant 0 : index
    %c0_16 = arith.constant 0 : index
    %21 = vector.load %arg3[%c1_14, %c0_15, %c0_16] : memref<3x128x128xbf16, #tpu.memory_space<vmem>>, vector<1x128x128xbf16>
    %22 = vector.shape_cast %21 : vector<1x128x128xbf16> to vector<128x128xbf16>
    %cst_17 = arith.constant dense<0.000000e+00> : vector<8x128xf32>
    %23 = tpu.matmul %20, %22, %cst_17 {dimension_numbers = #tpu.dot_dimension_numbers<[1], [0], [0], [1], [0, 0, 1, 1], [], []>} : vector<8x128xbf16>, vector<128x128xbf16>, vector<8x128xf32> -> vector<8x128xf32>
    %c2 = arith.constant 2 : index
    %c0_18 = arith.constant 0 : index
    %c0_19 = arith.constant 0 : index
    %24 = vector.load %arg4[%c2, %c0_18, %c0_19] : memref<4x1x128xf32, #tpu.memory_space<vmem>>, vector<1x1x128xf32>
    %25 = vector.shape_cast %24 : vector<1x1x128xf32> to vector<1x128xf32>
    %26 = vector.broadcast %25 : vector<1x128xf32> to vector<8x128xf32>
    %27 = arith.addf %23, %26 : vector<8x128xf32>
    %cst_20 = arith.constant 0.000000e+00 : f32
    %28 = vector.broadcast %cst_20 : f32 to vector<8x128xf32>
    %29 = arith.maximumf %27, %28 : vector<8x128xf32>
    %30 = arith.truncf %29 : vector<8x128xf32> to vector<8x128xbf16>
    %c2_21 = arith.constant 2 : index
    %c0_22 = arith.constant 0 : index
    %c0_23 = arith.constant 0 : index
    %31 = vector.load %arg3[%c2_21, %c0_22, %c0_23] : memref<3x128x128xbf16, #tpu.memory_space<vmem>>, vector<1x128x128xbf16>
    %32 = vector.shape_cast %31 : vector<1x128x128xbf16> to vector<128x128xbf16>
    %cst_24 = arith.constant dense<0.000000e+00> : vector<8x128xf32>
    %33 = tpu.matmul %30, %32, %cst_24 {dimension_numbers = #tpu.dot_dimension_numbers<[1], [0], [0], [1], [0, 0, 1, 1], [], []>} : vector<8x128xbf16>, vector<128x128xbf16>, vector<8x128xf32> -> vector<8x128xf32>
    %c3 = arith.constant 3 : index
    %c0_25 = arith.constant 0 : index
    %c0_26 = arith.constant 0 : index
    %34 = vector.load %arg4[%c3, %c0_25, %c0_26] : memref<4x1x128xf32, #tpu.memory_space<vmem>>, vector<1x1x128xf32>
    %35 = vector.shape_cast %34 : vector<1x1x128xf32> to vector<1x128xf32>
    %36 = vector.broadcast %35 : vector<1x128xf32> to vector<8x128xf32>
    %37 = arith.addf %33, %36 : vector<8x128xf32>
    %38 = vector.extract_strided_slice %37 {offsets = [0, 0], sizes = [8, 1], strides = [1, 1]} : vector<8x128xf32> to vector<8x1xf32>
    %c0_27 = arith.constant 0 : index
    %c0_28 = arith.constant 0 : index
    %39 = vector.load %arg5[%c0_27, %c0_28] : memref<8x1xf32, #tpu.memory_space<vmem>>, vector<8x1xf32>
    tpu.vector_store %arg5[%c0_27, %c0_28], %38 {strides = array<i32>} : memref<8x1xf32, #tpu.memory_space<vmem>>, vector<8x1xf32>,
    return
  }
  func.func @transform_0(%arg0: i32) -> (i32, i32) {
    %c0_i32 = arith.constant 0 : i32
    %c0_i32_0 = arith.constant 0 : i32
    return %arg0, %c0_i32 : i32, i32
  }
  func.func @transform_1(%arg0: i32) -> (i32, i32) {
    %c0_i32 = arith.constant 0 : i32
    %c0_i32_0 = arith.constant 0 : i32
    %c0_i32_1 = arith.constant 0 : i32
    return %c0_i32, %c0_i32_0 : i32, i32
  }
  func.func @transform_2(%arg0: i32) -> (i32, i32, i32) {
    %c0_i32 = arith.constant 0 : i32
    %c0_i32_0 = arith.constant 0 : i32
    %c0_i32_1 = arith.constant 0 : i32
    %c0_i32_2 = arith.constant 0 : i32
    return %c0_i32, %c0_i32_0, %c0_i32_1 : i32, i32, i32
  }
  func.func @transform_3(%arg0: i32) -> (i32, i32, i32) {
    %c0_i32 = arith.constant 0 : i32
    %c0_i32_0 = arith.constant 0 : i32
    %c0_i32_1 = arith.constant 0 : i32
    %c0_i32_2 = arith.constant 0 : i32
    return %c0_i32, %c0_i32_0, %c0_i32_1 : i32, i32, i32
  }
  func.func @transform_4(%arg0: i32) -> (i32, i32) {
    %c0_i32 = arith.constant 0 : i32
    %c0_i32_0 = arith.constant 0 : i32
    return %arg0, %c0_i32 : i32, i32
  }
}

</mosaic_0001>

<llo_original>
// kernel: weather_forward.1
$region0: #{weather_forward.1}
  #allocation0 [shape = 'u32[]', space=smem, size = 0x4, offset = 0x4, fixed_abs, tag = 'smem constant byte address 0x4 - core index']
  #allocation1 [shape = 'u32[144,128]{1,0:T(1,128)}', space=vmem, size = 0x12000, scoped, tag = 'internal scratch']
  %s0 = inlined_call_operand.hbm [shape: f32[32,123], index: 0, kind: input, shape index: {}]
  %s1 = inlined_call_operand.hbm [shape: bf16[123,128], index: 1, kind: input, shape index: {}]
  %s2 = inlined_call_operand.hbm [shape: bf16[3,128,128], index: 2, kind: input, shape index: {}]
  %s3 = inlined_call_operand.vmem [shape: f32[4,1,128], index: 3, kind: input, shape index: {}]
  %s4 = inlined_call_operand.vmem [shape: f32[32,1], index: 4, kind: output, shape index: {}]
  %s5 = sld [smem:[#allocation0]]
  $region61: #{weather_forward.1} parent=0
    _
  %s7 = ssub.s32 1, %s5
  %s8 = scalar_select 0, %s7, %s5
  $region1: #{weather_forward.1} parent=0
    #allocation2 [shape = 'u8[8192]{0}', space=vmem, size = 0x2000, scoped, tag = 'input window, operand 0']
    #allocation3 [shape = 's32[2]{0}', space=sflag, size = 0x8, scoped, tag = 'scoped memory for weather_forward.1']
    #allocation4 [shape = 'u8[32768]{0}', space=vmem, size = 0x8000, scoped, tag = 'input window, operand 1, single buffered']
    #allocation5 [shape = 's32[1]{0}', space=sflag, size = 0x4, scoped, tag = 'scoped memory for weather_forward.1']
    #allocation6 [shape = 'u8[98304]{0}', space=vmem, size = 0x18000, scoped, tag = 'input window, operand 2, single buffered']
    %9 = vsyncpa [#allocation3], 0
    %s10 = scalar_lea.sflag [#allocation3], 1
    %11 = vsyncpa %s10, 0
    %12 = vsyncpa [#allocation5], 0
    loop: start=0, step=1, limit=6
    $region2: #{weather_forward.1} parent=1 // loop_pre_header
      _
    $region3: #{weather_forward.1} parent=1 // loop_header
      %s14 = sphi 0, %s18
      %p15 = scmp.ge.s32.totalorder %s14, 6
      %s24 = sphi 0, %s26
      %s27 = sphi 0, %s24
      %s28 = sphi 0, %s27
      %s44 = sphi 0, %s28
      %s48 = sphi 0, %s48
      %s50 = sphi 0, %s48
      %s51 = sphi 0, %s50
      %s65 = sphi 0, %s51
      %s69 = sphi 0, %s69
      %s71 = sphi 0, %s69
      %s72 = sphi 0, %s71
      %s86 = sphi 0, %s72
      %s90 = sphi 0, %s90
      %s92 = sphi 0, %s90
      %s93 = sphi 0, %s92
      %s107 = sphi 0, %s93
      %s113 = sphi 0, %s115
      %s116 = sphi 0, %s113
      %s117 = sphi 0, %s116
      %s133 = sphi 0, %s117
    $region4: #{weather_forward.1} parent=1 // loop_header_branch
      %17 = sbr.rel (%p15) target = $region8
    $region5: #{weather_forward.1} parent=1 // loop_body
      %s19 = ssub.s32 %s14, 1
      %s20 = ssub.s32 %s14, 2
      %s21 = sadd.s32 %s14, 1
      %s22 = ssub.s32 %s14, %s21
      %p23 = scmp.eq.s32.totalorder %s22, 0
      %s25 = sadd.s32 %s24, 1
      %s26 = scalar_select %p23, %s24, %s25
      %p29 = pneg %p23
      %p30 = scmp.eq.s32.totalorder %s14, 3
      %p31 = por %p29, %p30
      %p32 = scmp.ne.s32.totalorder %s24, %s27
      %p33 = scmp.eq.s32.totalorder %s14, 0
      %p34 = por %p32, %p33
      %p35 = scmp.ne.s32.totalorder %s24, %s27
      %p36 = scmp.eq.s32.totalorder %s19, 3
      %p37 = por %p35, %p36
      %p38 = scmp.ne.s32.totalorder %s27, %s28
      %p39 = scmp.eq.s32.totalorder %s19, 0
      %p40 = por %p38, %p39
      %p41 = scmp.ne.s32.totalorder %s27, %s28
      %p42 = scmp.eq.s32.totalorder %s20, 3
      %p43 = por %p41, %p42
      %p45 = scmp.ne.s32.totalorder %s28, %s44
      %p46 = scmp.eq.s32.totalorder %s20, 0
      %p47 = por %p45, %p46
      %s49 = sadd.s32 %s48, 1
      %p52 = scmp.eq.s32.totalorder %s14, 3
      %p53 = scmp.ne.s32.totalorder %s48, %s50
      %p54 = scmp.eq.s32.totalorder %s14, 0
      %p55 = por %p53, %p54
      %p56 = scmp.ne.s32.totalorder %s48, %s50
      %p57 = scmp.eq.s32.totalorder %s19, 3
      %p58 = por %p56, %p57
      %p59 = scmp.ne.s32.totalorder %s50, %s51
      %p60 = scmp.eq.s32.totalorder %s19, 0
      %p61 = por %p59, %p60
      %p62 = scmp.ne.s32.totalorder %s50, %s51
      %p63 = scmp.eq.s32.totalorder %s20, 3
      %p64 = por %p62, %p63
      %p66 = scmp.ne.s32.totalorder %s51, %s65
      %p67 = scmp.eq.s32.totalorder %s20, 0
      %p68 = por %p66, %p67
      %s70 = sadd.s32 %s69, 1
      %p73 = scmp.eq.s32.totalorder %s14, 3
      %p74 = scmp.ne.s32.totalorder %s69, %s71
      %p75 = scmp.eq.s32.totalorder %s14, 0
      %p76 = por %p74, %p75
      %p77 = scmp.ne.s32.totalorder %s69, %s71
      %p78 = scmp.eq.s32.totalorder %s19, 3
      %p79 = por %p77, %p78
      %p80 = scmp.ne.s32.totalorder %s71, %s72
      %p81 = scmp.eq.s32.totalorder %s19, 0
      %p82 = por %p80, %p81
      %p83 = scmp.ne.s32.totalorder %s71, %s72
      %p84 = scmp.eq.s32.totalorder %s20, 3
      %p85 = por %p83, %p84
      %p87 = scmp.ne.s32.totalorder %s72, %s86
      %p88 = scmp.eq.s32.totalorder %s20, 0
      %p89 = por %p87, %p88
      %s91 = sadd.s32 %s90, 1
      %p94 = scmp.eq.s32.totalorder %s14, 3
      %p95 = scmp.ne.s32.totalorder %s90, %s92
      %p96 = scmp.eq.s32.totalorder %s14, 0
      %p97 = por %p95, %p96
      %p98 = scmp.ne.s32.totalorder %s90, %s92
      %p99 = scmp.eq.s32.totalorder %s19, 3
      %p100 = por %p98, %p99
      %p101 = scmp.ne.s32.totalorder %s92, %s93
      %p102 = scmp.eq.s32.totalorder %s19, 0
      %p103 = por %p101, %p102
      %p104 = scmp.ne.s32.totalorder %s92, %s93
      %p105 = scmp.eq.s32.totalorder %s20, 3
      %p106 = por %p104, %p105
      %p108 = scmp.ne.s32.totalorder %s93, %s107
      %p109 = scmp.eq.s32.totalorder %s20, 0
      %p110 = por %p108, %p109
      %s111 = ssub.s32 %s14, %s21
      %p112 = scmp.eq.s32.totalorder %s111, 0
      %s114 = sadd.s32 %s113, 1
      %s115 = scalar_select %p112, %s113, %s114
      %p118 = pneg %p112
      %p119 = scmp.eq.s32.totalorder %s14, 3
      %p120 = por %p118, %p119
      %p121 = scmp.ne.s32.totalorder %s113, %s116
      %p122 = scmp.eq.s32.totalorder %s14, 0
      %p123 = por %p121, %p122
      %p124 = scmp.ne.s32.totalorder %s113, %s116
      %p125 = scmp.eq.s32.totalorder %s19, 3
      %p126 = por %p124, %p125
      %p127 = scmp.ne.s32.totalorder %s116, %s117
      %p128 = scmp.eq.s32.totalorder %s19, 0
      %p129 = por %p127, %p128
      %p130 = scmp.ne.s32.totalorder %s116, %s117
      %p131 = scmp.eq.s32.totalorder %s20, 3
      %p132 = por %p130, %p131
      %p134 = scmp.ne.s32.totalorder %s117, %s133
      %p135 = scmp.eq.s32.totalorder %s20, 0
      %p136 = por %p134, %p135
      %p137 = scmp.le.s32.totalorder 1, %s14
      %p138 = scmp.lt.s32.totalorder %s14, 5
      %p139 = pnand %p137, %p138
      %p140 = pneg %p139
      // Predicated region
      $region9: #{weather_forward.1} parent=5 // pred_check
        _
      $region10: #{weather_forward.1} parent=5 // pred_check_branch
        %142 = sbr.rel (%p139) target = $region12
      $region11: #{weather_forward.1} parent=5 // pred_region
        %s143 = ssub.s32 %s14, 1
        // Predicated region
        $region13: #{weather_forward.1} parent=11 // pred_check
          %p144 = pneg %p61
        $region14: #{weather_forward.1} parent=11 // pred_check_branch
          %146 = sbr.rel (%p144) target = $region16
        $region15: #{weather_forward.1} parent=11 // pred_region
          %s148 = ssub.s32 1024, 1024
          %149 = vsyncadd [#allocation5], %s148
          %s150 = sshll.u32 [#allocation4], 4
          %s151 = int_to_ptr.vmem [resolvable:$true] %s150
          %156 = dma.hbm_to_vmem [thread:$0]  %s1, 1024, %s151, [#allocation5], 64, 64, 4
        $region16: #{weather_forward.1} parent=11 // pred_fallthru
          _
        // Predicated region
        $region17: #{weather_forward.1} parent=11 // pred_check
          %p157 = pneg %p82
        $region18: #{weather_forward.1} parent=11 // pred_check_branch
          %159 = sbr.rel (%p157) target = $region20
        $region19: #{weather_forward.1} parent=11 // pred_region
          %s161 = ssub.s32 3072, 3072
          %162 = vsyncadd [#allocation5], %s161
          %s163 = sshll.u32 [#allocation6], 4
          %s164 = int_to_ptr.vmem [resolvable:$true] %s163
          %169 = dma.hbm_to_vmem [thread:$0]  %s2, 3072, %s164, [#allocation5], 64, 64, 4
        $region20: #{weather_forward.1} parent=11 // pred_fallthru
          _
        // Predicated region
        $region21: #{weather_forward.1} parent=11 // pred_check
          %p170 = pneg %p103
        $region22: #{weather_forward.1} parent=11 // pred_check_branch
          %172 = sbr.rel (%p170) target = $region24
        $region23: #{weather_forward.1} parent=11 // pred_region
          _
        $region24: #{weather_forward.1} parent=11 // pred_fallthru
          _
      $region12: #{weather_forward.1} parent=5 // pred_fallthru
        _
      %p173 = scmp.lt.s32.totalorder %s14, 4
      // Predicated region
      $region25: #{weather_forward.1} parent=5 // pred_check
        %p174 = pneg %p173
      $region26: #{weather_forward.1} parent=5 // pred_check_branch
        %176 = sbr.rel (%p174) target = $region28
      $region27: #{weather_forward.1} parent=5 // pred_region
        // Predicated region
        $region29: #{weather_forward.1} parent=27 // pred_check
          %p177 = pneg %p34
        $region30: #{weather_forward.1} parent=27 // pred_check_branch
          %179 = sbr.rel (%p177) target = $region32
        $region31: #{weather_forward.1} parent=27 // pred_region
          %s180 = sand.u32 %s24, 1
          %s181 = scalar_lea.sflag [#allocation3], %s180
          %s182 = sand.u32 %s24, 1
          %s183 = smul.addr %s182, 8
          %s184 = scalar_lea.vmem [#allocation2], %s183
          %s186 = ssub.s32 128, 128
          %187 = vsyncadd %s181, %s186
          %s188 = smul.addr %s14, 128
          %s189 = scalar_lea.hbm %s0, %s188
          %s191 = sshll.u32 %s184, 4
          %s192 = int_to_ptr.vmem [resolvable:$true] %s191
          %194 = dma.hbm_to_vmem [thread:$0]  %s189, 128, %s192, %s181
        $region32: #{weather_forward.1} parent=27 // pred_fallthru
          _
      $region28: #{weather_forward.1} parent=5 // pred_fallthru
        _
      %p195 = scmp.le.s32.totalorder 1, %s14
      %p196 = scmp.lt.s32.totalorder %s14, 5
      %p197 = pnand %p195, %p196
      %p198 = pneg %p197
      // Predicated region
      $region33: #{weather_forward.1} parent=5 // pred_check
        _
      $region34: #{weather_forward.1} parent=5 // pred_check_branch
        %200 = sbr.rel (%p197) target = $region36
      $region35: #{weather_forward.1} parent=5 // pred_region
        %s201 = ssub.s32 %s14, 1
        %s202 = sand.u32 %s27, 1
        %s203 = scalar_lea.sflag [#allocation3], %s202
        %s204 = sand.u32 %s27, 1
        %s205 = smul.addr %s204, 8
        %s206 = scalar_lea.vmem [#allocation2], %s205
        // Predicated region
        $region37: #{weather_forward.1} parent=35 // pred_check
          %p207 = pneg %p40
        $region38: #{weather_forward.1} parent=35 // pred_check_branch
          %209 = sbr.rel (%p207) target = $region40
        $region39: #{weather_forward.1} parent=35 // pred_region
          %210 = dma.done %s203, 128
        $region40: #{weather_forward.1} parent=35 // pred_fallthru
          _
        // Predicated region
        $region41: #{weather_forward.1} parent=35 // pred_check
          %p211 = pneg %p61
        $region42: #{weather_forward.1} parent=35 // pred_check_branch
          %213 = sbr.rel (%p211) target = $region44
        $region43: #{weather_forward.1} parent=35 // pred_region
          %214 = dma.done [#allocation5], 1024
        $region44: #{weather_forward.1} parent=35 // pred_fallthru
          _
        // Predicated region
        $region45: #{weather_forward.1} parent=35 // pred_check
          %p215 = pneg %p82
        $region46: #{weather_forward.1} parent=35 // pred_check_branch
          %217 = sbr.rel (%p215) target = $region48
        $region47: #{weather_forward.1} parent=35 // pred_region
          %218 = dma.done [#allocation5], 3072
        $region48: #{weather_forward.1} parent=35 // pred_fallthru
          _
        %s219 = sand.u32 %s27, 1
        %s220 = scalar_lea.sflag [#allocation3], %s219
        %s221 = sand.u32 %s27, 1
        %s222 = smul.addr %s221, 8
        %s223 = scalar_lea.vmem [#allocation2], %s222
        %p224 = pneg %p40
        %p225 = pneg %p37
        %p226 = pneg %p61
        %p227 = pneg %p58
        %p228 = pneg %p82
        %p229 = pneg %p79
        %p230 = pneg %p103
        %p231 = pneg %p100
        %p232 = pneg %p129
        %p233 = pneg %p126
        %p234 = scmp.lt.s32.totalorder %s19, 3
        %s235 = scalar_select %p234, %s19, 3
        %s236 = smul.addr %s235, 8
        %s237 = scalar_lea.vmem %s4, %s236
        %p238 = scmp.lt.s32.totalorder %s19, 3
        %s239 = scalar_select %p238, %s19, 3
        %s240 = smul.addr %s239, 8
        %s241 = scalar_lea.vmem %s4, %s240
        %v243 = vld [vmem:[%s206] sm:$0xff]
        %v244 = vpack.c.bf16 %v243, %v243
        %v245 = vld [vmem:[#allocation4] sm:$0xf]
        %v246 = vld [vmem:[#allocation4 + $0x4] sm:$0xf]
        %v247 = vld [vmem:[#allocation4 + $0x8] sm:$0xf]
        %v248 = vld [vmem:[#allocation4 + $0xc] sm:$0xf]
        %v249 = vld [vmem:[#allocation4 + $0x10] sm:$0xf]
        %v250 = vld [vmem:[#allocation4 + $0x14] sm:$0xf]
        %v251 = vld [vmem:[#allocation4 + $0x18] sm:$0xf]
        %v252 = vld [vmem:[#allocation4 + $0x1c] sm:$0xf]
        %v253 = vld [vmem:[#allocation4 + $0x20] sm:$0xf]
        %v254 = vld [vmem:[#allocation4 + $0x24] sm:$0xf]
        %v255 = vld [vmem:[#allocation4 + $0x28] sm:$0xf]
        %v256 = vld [vmem:[#allocation4 + $0x2c] sm:$0xf]
        %v257 = vld [vmem:[#allocation4 + $0x30] sm:$0xf]
        %v258 = vld [vmem:[#allocation4 + $0x34] sm:$0xf]
        %v259 = vld [vmem:[#allocation4 + $0x38] sm:$0xf]
        %v260 = vld [vmem:[#allocation4 + $0x3c] sm:$0x3]
        %v261 = vld [vmem:[%s3] sm:$0x1]
        %v263 = vlaneseq
        %v264 = vshrl.u32 %v263, 7
        %v265 = vsub.s32 0, %v264
        %v266 = vrot.slane %v261, %v265
        %v284 = vunpack.c.l.b16 %v245
        %v285 = vunpack.c.l.b16 %v246
        %v286 = vunpack.c.l.b16 %v247
        %v287 = vunpack.c.l.b16 %v248
        %v288 = vunpack.c.l.b16 %v249
        %v289 = vunpack.c.l.b16 %v250
        %v290 = vunpack.c.l.b16 %v251
        %v291 = vunpack.c.l.b16 %v252
        %v292 = vunpack.c.l.b16 %v253
        %v293 = vunpack.c.l.b16 %v254
        %v294 = vunpack.c.l.b16 %v255
        %v295 = vunpack.c.l.b16 %v256
        %v296 = vunpack.c.l.b16 %v257
        %v297 = vunpack.c.l.b16 %v258
        %v298 = vunpack.c.l.b16 %v259
        %v299 = vunpack.c.l.b16 %v260
        %v300 = vpack.c.b16 %v285, %v284
        %v301 = vpack.c.b16 %v287, %v286
        %v302 = vpack.c.b16 %v289, %v288
        %v303 = vpack.c.b16 %v291, %v290
        %v304 = vpack.c.b16 %v293, %v292
        %v305 = vpack.c.b16 %v295, %v294
        %v306 = vpack.c.b16 %v297, %v296
        %v307 = vpack.c.b16 %v299, %v298
        %vm315 = vcmask 1006592
        %v317 = vsel %vm315, %v244, 0
        %vm319 = vcmask 1044480
        %vm320 = vcmask 1045504
        %v321 = vsel %vm319, 4294967295, 65535
        %v322 = vsel %vm320, %v321, 0
        %v324 = vand.u32 %v307, %v322
        %326 = vmatprep.subr.bf16.mxu0 0
        %327 = vmatpush1.bf16.msra.mxu0 %v300
        %328 = vmatprep.subr.bf16.mxu0 0
        %329 = vmatpush1.bf16.msra.mxu0 %v301
        %330 = vmatprep.subr.bf16.mxu0 0
        %331 = vmatpush1.bf16.msra.mxu0 %v302
        %332 = vmatprep.subr.bf16.mxu0 0
        %333 = vmatpush1.bf16.msra.mxu0 %v303
        %334 = vmatprep.subr.bf16.mxu0 0
        %335 = vmatpush1.bf16.msra.mxu0 %v304
        %336 = vmatprep.subr.bf16.mxu0 0
        %337 = vmatpush1.bf16.msra.mxu0 %v305
        %338 = vmatprep.subr.bf16.mxu0 0
        %339 = vmatpush1.bf16.msra.mxu0 %v306
        %340 = vmatprep.subr.bf16.mxu0 0
        %341 = vmatpush1.bf16.msra.mxu0 %v324
        %342 = vmatprep.subr.bf16.mxu0 0
        %343 = vmatpush1.bf16.msra.mxu0 0
        %344 = vmatprep.subr.bf16.mxu0 0
        %345 = vmatpush1.bf16.msra.mxu0 0
        %346 = vmatprep.subr.bf16.mxu0 0
        %347 = vmatpush1.bf16.msra.mxu0 0
        %348 = vmatprep.subr.bf16.mxu0 0
        %349 = vmatpush1.bf16.msra.mxu0 0
        %350 = vmatprep.subr.bf16.mxu0 0
        %351 = vmatpush1.bf16.msra.mxu0 0
        %352 = vmatprep.subr.bf16.mxu0 0
        %353 = vmatpush1.bf16.msra.mxu0 0
        %354 = vmatprep.subr.bf16.mxu0 0
        %355 = vmatpush1.bf16.msra.mxu0 0
        %356 = vmatprep.subr.bf16.mxu0 0
        %357 = vmatpush1.bf16.msra.mxu0 0
        %358 = vmatprep.mubr.bf16.mxu0 0
        %359 = vmatmul.mubr.bf16.gmra.mrb[0].mxu0 %v317
        %v360 = vpop.f32.mrb[0].mxu0
        %v361 = vadd.f32 %v266, %v360
        %v362 = vpop.f32.mrb[0].mxu0
        %v363 = vpop.f32.mrb[0].mxu0
        %v364 = vpop.f32.mrb[0].mxu0
        %365 = vdwg.mxu0
        %v366 = vmax.f32 %v361, 0.0
        %v367 = vpack.c.bf16 %v366, %v366
        %v368 = vld [vmem:[#allocation6] sm:$0xf]
        %v369 = vld [vmem:[#allocation6 + $0x4] sm:$0xf]
        %v370 = vld [vmem:[#allocation6 + $0x8] sm:$0xf]
        %v371 = vld [vmem:[#allocation6 + $0xc] sm:$0xf]
        %v372 = vld [vmem:[#allocation6 + $0x10] sm:$0xf]
        %v373 = vld [vmem:[#allocation6 + $0x14] sm:$0xf]
        %v374 = vld [vmem:[#allocation6 + $0x18] sm:$0xf]
        %v375 = vld [vmem:[#allocation6 + $0x1c] sm:$0xf]
        %v376 = vld [vmem:[#allocation6 + $0x20] sm:$0xf]
        %v377 = vld [vmem:[#allocation6 + $0x24] sm:$0xf]
        %v378 = vld [vmem:[#allocation6 + $0x28] sm:$0xf]
        %v379 = vld [vmem:[#allocation6 + $0x2c] sm:$0xf]
        %v380 = vld [vmem:[#allocation6 + $0x30] sm:$0xf]
        %v381 = vld [vmem:[#allocation6 + $0x34] sm:$0xf]
        %v382 = vld [vmem:[#allocation6 + $0x38] sm:$0xf]
        %v383 = vld [vmem:[#allocation6 + $0x3c] sm:$0xf]
        %s384 = scalar_lea.vmem %s3, 1
        %v385 = vld [vmem:[%s384] sm:$0x1]
        %v387 = vlaneseq
        %v388 = vshrl.u32 %v387, 7
        %v389 = vsub.s32 0, %v388
        %v390 = vrot.slane %v385, %v389
        %v408 = vunpack.c.l.b16 %v368
        %v409 = vunpack.c.l.b16 %v369
        %v410 = vunpack.c.l.b16 %v370
        %v411 = vunpack.c.l.b16 %v371
        %v412 = vunpack.c.l.b16 %v372
        %v413 = vunpack.c.l.b16 %v373
        %v414 = vunpack.c.l.b16 %v374
        %v415 = vunpack.c.l.b16 %v375
        %v416 = vunpack.c.l.b16 %v376
        %v417 = vunpack.c.l.b16 %v377
        %v418 = vunpack.c.l.b16 %v378
        %v419 = vunpack.c.l.b16 %v379
        %v420 = vunpack.c.l.b16 %v380
        %v421 = vunpack.c.l.b16 %v381
        %v422 = vunpack.c.l.b16 %v382
        %v423 = vunpack.c.l.b16 %v383
        %v424 = vpack.c.b16 %v409, %v408
        %v425 = vpack.c.b16 %v411, %v410
        %v426 = vpack.c.b16 %v413, %v412
        %v427 = vpack.c.b16 %v415, %v414
        %v428 = vpack.c.b16 %v417, %v416
        %v429 = vpack.c.b16 %v419, %v418
        %v430 = vpack.c.b16 %v421, %v420
        %v431 = vpack.c.b16 %v423, %v422
        %440 = vmatprep.subr.bf16.mxu0 0
        %441 = vmatpush1.bf16.msra.mxu0 %v424
        %442 = vmatprep.subr.bf16.mxu0 0
        %443 = vmatpush1.bf16.msra.mxu0 %v425
        %444 = vmatprep.subr.bf16.mxu0 0
        %445 = vmatpush1.bf16.msra.mxu0 %v426
        %446 = vmatprep.subr.bf16.mxu0 0
        %447 = vmatpush1.bf16.msra.mxu0 %v427
        %448 = vmatprep.subr.bf16.mxu0 0
        %449 = vmatpush1.bf16.msra.mxu0 %v428
        %450 = vmatprep.subr.bf16.mxu0 0
        %451 = vmatpush1.bf16.msra.mxu0 %v429
        %452 = vmatprep.subr.bf16.mxu0 0
        %453 = vmatpush1.bf16.msra.mxu0 %v430
        %454 = vmatprep.subr.bf16.mxu0 0
        %455 = vmatpush1.bf16.msra.mxu0 %v431
        %456 = vmatprep.subr.bf16.mxu0 0
        %457 = vmatpush1.bf16.msra.mxu0 0
        %458 = vmatprep.subr.bf16.mxu0 0
        %459 = vmatpush1.bf16.msra.mxu0 0
        %460 = vmatprep.subr.bf16.mxu0 0
        %461 = vmatpush1.bf16.msra.mxu0 0
        %462 = vmatprep.subr.bf16.mxu0 0
        %463 = vmatpush1.bf16.msra.mxu0 0
        %464 = vmatprep.subr.bf16.mxu0 0
        %465 = vmatpush1.bf16.msra.mxu0 0
        %466 = vmatprep.subr.bf16.mxu0 0
        %467 = vmatpush1.bf16.msra.mxu0 0
        %468 = vmatprep.subr.bf16.mxu0 0
        %469 = vmatpush1.bf16.msra.mxu0 0
        %470 = vmatprep.subr.bf16.mxu0 0
        %471 = vmatpush1.bf16.msra.mxu0 0
        %472 = vmatprep.mubr.bf16.mxu0 0
        %473 = vmatmul.mubr.bf16.gmra.mrb[0].mxu0 %v367
        %v474 = vpop.f32.mrb[0].mxu0
        %v475 = vadd.f32 %v390, %v474
        %v476 = vpop.f32.mrb[0].mxu0
        %v477 = vpop.f32.mrb[0].mxu0
        %v478 = vpop.f32.mrb[0].mxu0
        %479 = vdwg.mxu0
        %v480 = vmax.f32 %v475, 0.0
        %v481 = vpack.c.bf16 %v480, %v480
        %s482 = scalar_lea.vmem [#allocation6], 64
        %v483 = vld [vmem:[%s482] sm:$0xf]
        %v484 = vld [vmem:[%s482 + $0x4] sm:$0xf]
        %v485 = vld [vmem:[%s482 + $0x8] sm:$0xf]
        %v486 = vld [vmem:[%s482 + $0xc] sm:$0xf]
        %v487 = vld [vmem:[%s482 + $0x10] sm:$0xf]
        %v488 = vld [vmem:[%s482 + $0x14] sm:$0xf]
        %v489 = vld [vmem:[%s482 + $0x18] sm:$0xf]
        %v490 = vld [vmem:[%s482 + $0x1c] sm:$0xf]
        %v491 = vld [vmem:[%s482 + $0x20] sm:$0xf]
        %v492 = vld [vmem:[%s482 + $0x24] sm:$0xf]
        %v493 = vld [vmem:[%s482 + $0x28] sm:$0xf]
        %v494 = vld [vmem:[%s482 + $0x2c] sm:$0xf]
        %v495 = vld [vmem:[%s482 + $0x30] sm:$0xf]
        %v496 = vld [vmem:[%s482 + $0x34] sm:$0xf]
        %v497 = vld [vmem:[%s482 + $0x38] sm:$0xf]
        %v498 = vld [vmem:[%s482 + $0x3c] sm:$0xf]
        %s499 = scalar_lea.vmem %s3, 2
        %v500 = vld [vmem:[%s499] sm:$0x1]
        %v502 = vlaneseq
        %v503 = vshrl.u32 %v502, 7
        %v504 = vsub.s32 0, %v503
        %v505 = vrot.slane %v500, %v504
        %v523 = vunpack.c.l.b16 %v483
        %v524 = vunpack.c.l.b16 %v484
        %v525 = vunpack.c.l.b16 %v485
        %v526 = vunpack.c.l.b16 %v486
        %v527 = vunpack.c.l.b16 %v487
        %v528 = vunpack.c.l.b16 %v488
        %v529 = vunpack.c.l.b16 %v489
        %v530 = vunpack.c.l.b16 %v490
        %v531 = vunpack.c.l.b16 %v491
        %v532 = vunpack.c.l.b16 %v492
        %v533 = vunpack.c.l.b16 %v493
        %v534 = vunpack.c.l.b16 %v494
        %v535 = vunpack.c.l.b16 %v495
        %v536 = vunpack.c.l.b16 %v496
        %v537 = vunpack.c.l.b16 %v497
        %v538 = vunpack.c.l.b16 %v498
        %v539 = vpack.c.b16 %v524, %v523
        %v540 = vpack.c.b16 %v526, %v525
        %v541 = vpack.c.b16 %v528, %v527
        %v542 = vpack.c.b16 %v530, %v529
        %v543 = vpack.c.b16 %v532, %v531
        %v544 = vpack.c.b16 %v534, %v533
        %v545 = vpack.c.b16 %v536, %v535
        %v546 = vpack.c.b16 %v538, %v537
        %555 = vmatprep.subr.bf16.mxu0 0
        %556 = vmatpush1.bf16.msra.mxu0 %v539
        %557 = vmatprep.subr.bf16.mxu0 0
        %558 = vmatpush1.bf16.msra.mxu0 %v540
        %559 = vmatprep.subr.bf16.mxu0 0
        %560 = vmatpush1.bf16.msra.mxu0 %v541
        %561 = vmatprep.subr.bf16.mxu0 0
        %562 = vmatpush1.bf16.msra.mxu0 %v542
        %563 = vmatprep.subr.bf16.mxu0 0
        %564 = vmatpush1.bf16.msra.mxu0 %v543
        %565 = vmatprep.subr.bf16.mxu0 0
        %566 = vmatpush1.bf16.msra.mxu0 %v544
        %567 = vmatprep.subr.bf16.mxu0 0
        %568 = vmatpush1.bf16.msra.mxu0 %v545
        %569 = vmatprep.subr.bf16.mxu0 0
        %570 = vmatpush1.bf16.msra.mxu0 %v546
        %571 = vmatprep.subr.bf16.mxu0 0
        %572 = vmatpush1.bf16.msra.mxu0 0
        %573 = vmatprep.subr.bf16.mxu0 0
        %574 = vmatpush1.bf16.msra.mxu0 0
        %575 = vmatprep.subr.bf16.mxu0 0
        %576 = vmatpush1.bf16.msra.mxu0 0
        %577 = vmatprep.subr.bf16.mxu0 0
        %578 = vmatpush1.bf16.msra.mxu0 0
        %579 = vmatprep.subr.bf16.mxu0 0
        %580 = vmatpush1.bf16.msra.mxu0 0
        %581 = vmatprep.subr.bf16.mxu0 0
        %582 = vmatpush1.bf16.msra.mxu0 0
        %583 = vmatprep.subr.bf16.mxu0 0
        %584 = vmatpush1.bf16.msra.mxu0 0
        %585 = vmatprep.subr.bf16.mxu0 0
        %586 = vmatpush1.bf16.msra.mxu0 0
        %587 = vmatprep.mubr.bf16.mxu0 0
        %588 = vmatmul.mubr.bf16.gmra.mrb[0].mxu0 %v481
        %v589 = vpop.f32.mrb[0].mxu0
        %v590 = vadd.f32 %v505, %v589
        %v591 = vpop.f32.mrb[0].mxu0
        %v592 = vpop.f32.mrb[0].mxu0
        %v593 = vpop.f32.mrb[0].mxu0
        %594 = vdwg.mxu0
        %v595 = vmax.f32 %v590, 0.0
        %v596 = vpack.c.bf16 %v595, %v595
        %s597 = scalar_lea.vmem [#allocation6], 128
        %v598 = vld [vmem:[%s597] sm:$0xf]
        %v599 = vld [vmem:[%s597 + $0x4] sm:$0xf]
        %v600 = vld [vmem:[%s597 + $0x8] sm:$0xf]
        %v601 = vld [vmem:[%s597 + $0xc] sm:$0xf]
        %v602 = vld [vmem:[%s597 + $0x10] sm:$0xf]
        %v603 = vld [vmem:[%s597 + $0x14] sm:$0xf]
        %v604 = vld [vmem:[%s597 + $0x18] sm:$0xf]
        %v605 = vld [vmem:[%s597 + $0x1c] sm:$0xf]
        %v606 = vld [vmem:[%s597 + $0x20] sm:$0xf]
        %v607 = vld [vmem:[%s597 + $0x24] sm:$0xf]
        %v608 = vld [vmem:[%s597 + $0x28] sm:$0xf]
        %v609 = vld [vmem:[%s597 + $0x2c] sm:$0xf]
        %v610 = vld [vmem:[%s597 + $0x30] sm:$0xf]
        %v611 = vld [vmem:[%s597 + $0x34] sm:$0xf]
        %v612 = vld [vmem:[%s597 + $0x38] sm:$0xf]
        %v613 = vld [vmem:[%s597 + $0x3c] sm:$0xf]
        %s614 = scalar_lea.vmem %s3, 3
        %v615 = vld [vmem:[%s614] sm:$0x1]
        %v617 = vlaneseq
        %v618 = vshrl.u32 %v617, 7
        %v619 = vsub.s32 0, %v618
        %v620 = vrot.slane %v615, %v619
        %v638 = vunpack.c.l.b16 %v598
        %v639 = vunpack.c.l.b16 %v599
        %v640 = vunpack.c.l.b16 %v600
        %v641 = vunpack.c.l.b16 %v601
        %v642 = vunpack.c.l.b16 %v602
        %v643 = vunpack.c.l.b16 %v603
        %v644 = vunpack.c.l.b16 %v604
        %v645 = vunpack.c.l.b16 %v605
        %v646 = vunpack.c.l.b16 %v606
        %v647 = vunpack.c.l.b16 %v607
        %v648 = vunpack.c.l.b16 %v608
        %v649 = vunpack.c.l.b16 %v609
        %v650 = vunpack.c.l.b16 %v610
        %v651 = vunpack.c.l.b16 %v611
        %v652 = vunpack.c.l.b16 %v612
        %v653 = vunpack.c.l.b16 %v613
        %v654 = vpack.c.b16 %v639, %v638
        %v655 = vpack.c.b16 %v641, %v640
        %v656 = vpack.c.b16 %v643, %v642
        %v657 = vpack.c.b16 %v645, %v644
        %v658 = vpack.c.b16 %v647, %v646
        %v659 = vpack.c.b16 %v649, %v648
        %v660 = vpack.c.b16 %v651, %v650
        %v661 = vpack.c.b16 %v653, %v652
        %670 = vmatprep.subr.bf16.mxu0 0
        %671 = vmatpush1.bf16.msra.mxu0 %v654
        %672 = vmatprep.subr.bf16.mxu0 0
        %673 = vmatpush1.bf16.msra.mxu0 %v655
        %674 = vmatprep.subr.bf16.mxu0 0
        %675 = vmatpush1.bf16.msra.mxu0 %v656
        %676 = vmatprep.subr.bf16.mxu0 0
        %677 = vmatpush1.bf16.msra.mxu0 %v657
        %678 = vmatprep.subr.bf16.mxu0 0
        %679 = vmatpush1.bf16.msra.mxu0 %v658
        %680 = vmatprep.subr.bf16.mxu0 0
        %681 = vmatpush1.bf16.msra.mxu0 %v659
        %682 = vmatprep.subr.bf16.mxu0 0
        %683 = vmatpush1.bf16.msra.mxu0 %v660
        %684 = vmatprep.subr.bf16.mxu0 0
        %685 = vmatpush1.bf16.msra.mxu0 %v661
        %686 = vmatprep.subr.bf16.mxu0 0
        %687 = vmatpush1.bf16.msra.mxu0 0
        %688 = vmatprep.subr.bf16.mxu0 0
        %689 = vmatpush1.bf16.msra.mxu0 0
        %690 = vmatprep.subr.bf16.mxu0 0
        %691 = vmatpush1.bf16.msra.mxu0 0
        %692 = vmatprep.subr.bf16.mxu0 0
        %693 = vmatpush1.bf16.msra.mxu0 0
        %694 = vmatprep.subr.bf16.mxu0 0
        %695 = vmatpush1.bf16.msra.mxu0 0
        %696 = vmatprep.subr.bf16.mxu0 0
        %697 = vmatpush1.bf16.msra.mxu0 0
        %698 = vmatprep.subr.bf16.mxu0 0
        %699 = vmatpush1.bf16.msra.mxu0 0
        %700 = vmatprep.subr.bf16.mxu0 0
        %701 = vmatpush1.bf16.msra.mxu0 0
        %702 = vmatprep.mubr.bf16.mxu0 0
        %703 = vmatmul.mubr.bf16.gmra.mrb[0].mxu0 %v596
        %v704 = vpop.f32.mrb[0].mxu0
        %v705 = vadd.f32 %v620, %v704
        %v706 = vpop.f32.mrb[0].mxu0
        %v707 = vpop.f32.mrb[0].mxu0
        %v708 = vpop.f32.mrb[0].mxu0
        %709 = vdwg.mxu0
        %vm710 = vcmask 7168
        %711 = vst.msk [vmem:[%s241] sm:$0xff] %vm710, %v705
        %p712 = scmp.lt.s32.totalorder %s19, 3
        %s713 = scalar_select %p712, %s19, 3
        %s714 = smul.addr %s713, 8
        %s715 = scalar_lea.vmem %s4, %s714
        // Predicated region
        $region49: #{weather_forward.1} parent=35 // pred_check
          %p716 = pneg %p126
        $region50: #{weather_forward.1} parent=35 // pred_check_branch
          %718 = sbr.rel (%p716) target = $region52
        $region51: #{weather_forward.1} parent=35 // pred_region
          _
        $region52: #{weather_forward.1} parent=35 // pred_fallthru
          _
      $region36: #{weather_forward.1} parent=5 // pred_fallthru
        _
      %p719 = scmp.le.s32.totalorder 2, %s14
      // Predicated region
      $region53: #{weather_forward.1} parent=5 // pred_check
        %p720 = pneg %p719
      $region54: #{weather_forward.1} parent=5 // pred_check_branch
        %722 = sbr.rel (%p720) target = $region56
      $region55: #{weather_forward.1} parent=5 // pred_region
        %s723 = ssub.s32 %s14, 2
        // Predicated region
        $region57: #{weather_forward.1} parent=55 // pred_check
          %p724 = pneg %p132
        $region58: #{weather_forward.1} parent=55 // pred_check_branch
          %726 = sbr.rel (%p724) target = $region60
        $region59: #{weather_forward.1} parent=55 // pred_region
          %p727 = scmp.lt.s32.totalorder %s20, 3
          %s728 = scalar_select %p727, %s20, 3
          %s729 = smul.addr %s728, 8
          %s730 = scalar_lea.vmem %s4, %s729
        $region60: #{weather_forward.1} parent=55 // pred_fallthru
          _
      $region56: #{weather_forward.1} parent=5 // pred_fallthru
        _
    $region6: #{weather_forward.1} parent=1 // loop_footer
      %s18 = sadd.s32 1, %s14
    $region7: #{weather_forward.1} parent=1 // loop_footer_branch
      %13 = sbr.rel target = $region3
    $region8: #{weather_forward.1} parent=1 // loop_exit
      _
    %731 = vsyncpa [#allocation3], 1
    %s732 = scalar_lea.sflag [#allocation3], 1
    %733 = vsyncpa %s732, 1
    %734 = vsyncpa [#allocation5], 1

</llo_original>
